<compile_context>
chip_gen: v5e
topology: v5e:2x2
jax: 0.10.0
libtpu: 0.0.40
codegen_flags: <defaults>
</compile_context>

<pallas_src>
import functools

import jax
import jax.numpy as jnp
from jax import lax
from jax.experimental import pallas as pl
from jax.experimental.pallas import tpu as pltpu

_SUB = 8      # f32 sublanes per vreg == time-chunk size for the scan
_LANE = 128


def _mdd_kernel(*refs, lambda_dd: float, n_time: int, has_target: bool):
    if has_target:
        r_ref, t_ref, dd_ref, mse_ref, rt_ref = refs
    else:
        r_ref, dd_ref, rt_ref = refs
        t_ref = mse_ref = None

    b = r_ref.shape[0]   # batch tile (sublanes of the natural [B, T] block)

    # Transpose the natural (b, T) block once (XLU) into VMEM scratch so the
    # sequential time scan walks sublanes while the independent batch dim is
    # 128-lane dense for every VALU op.
    rt_ref[...] = jnp.transpose(r_ref[...].astype(jnp.float32))      # (T, b)

    # Divide-free drawdown recurrence (no per-step divide, 2 carries):
    #   ratio_t  = cum_t / run_max_t = min(1, ratio_{t-1} * (1 + r_t)), ratio_0 = 1
    #   max_dd   = min_t ratio_t - 1
    ratio = jnp.ones((1, b), jnp.float32)
    min_ratio = ratio

    def scan_rows(chunk, j_start, j_stop, carry):
        ratio, min_ratio = carry
        for j in range(j_start, j_stop):                 # statically unrolled
            prod = ratio * (1.0 + chunk[j:j + 1, :])
            min_ratio = jnp.minimum(min_ratio, prod)
            ratio = jnp.minimum(1.0, prod)
        return ratio, min_ratio

    # Chunk 0 is peeled statically: t == 0 always has drawdown 0, so its row is
    # skipped (this also makes the recurrence independent of returns[:, 0]).
    c0 = min(_SUB, n_time)
    carry = scan_rows(rt_ref[pl.ds(0, c0), :], 1, c0, (ratio, min_ratio))

    n_mid = (n_time - c0) // _SUB          # full 8-row chunks after chunk 0
    rem = (n_time - c0) % _SUB
    if n_mid > 0:
        def chunk_step(c, carry):
            start = pl.multiple_of(c0 + c * _SUB, _SUB)
            return scan_rows(rt_ref[pl.ds(start, _SUB), :], 0, _SUB, carry)
        carry = lax.fori_loop(0, n_mid, chunk_step, carry)
    if rem > 0:
        start = c0 + n_mid * _SUB          # static
        carry = scan_rows(rt_ref[pl.ds(start, rem), :], 0, rem, carry)

    _, min_ratio = carry
    # loss_dd = -lambda_dd * max_drawdown = lambda_dd * (1 - min_ratio)
    dd_ref[...] = lambda_dd * (1.0 - min_ratio)

    # Optional MSE term, computed in the natural (b, T) layout.  No tail mask:
    # the time dim is never padded; padded batch rows are sliced off outside.
    if has_target:
        d = r_ref[...].astype(jnp.float32) - t_ref[...].astype(jnp.float32)
        mse_ref[...] = jnp.sum(d * d, axis=1, keepdims=True) * (1.0 / float(n_time))


def _round_up(x: int, m: int) -> int:
    return ((x + m - 1) // m) * m


def max_drawdown_loss(returns: jax.Array,
                      target_returns=None,
                      lambda_dd: float = 0.5,
                      reduction: str = "mean") -> jax.Array:
    """Matches PyTorch MaxDrawdownLoss.forward (reduction applied here)."""
    assert returns.ndim == 2, "returns must be [batch_size, time_steps]"
    B, T = returns.shape
    assert T >= 1, "need at least one time step"
    has_target = target_returns is not None
    if has_target:
        assert target_returns.shape == returns.shape

    itemsize = jnp.dtype(returns.dtype).itemsize
    n_inputs = 2 if has_target else 1

    # Batch tile: batch lives on sublanes of the natural [B, T] block and on
    # lanes after the in-kernel transpose.  Sized so the per-step VMEM footprint
    # (double-buffered inputs + f32 transpose scratch + temporaries) stays
    # roughly <= 16 MiB (fits v5e/v6e/v7x), and so that B > 128 yields >= 2
    # blocks for the "parallel" axis (both v7x TensorCores busy).
    if B <= _LANE:
        b_tile = B                       # single block == full array, no padding
    else:
        b_tile = min(4 * _LANE, max(_LANE, _round_up((B + 1) // 2, _LANE)))
        budget = 16 * 1024 * 1024

        def vmem_est(bt):
            return bt * T * (n_inputs * 2 * itemsize + 3 * 4)

        while b_tile > _LANE and vmem_est(b_tile) > budget:
            b_tile //= 2

    B_pad = _round_up(B, b_tile)
    r, tgt = returns, target_returns
    if B_pad != B:
        r = jnp.pad(r, ((0, B_pad - B), (0, 0)))
        if has_target:
            tgt = jnp.pad(tgt, ((0, B_pad - B), (0, 0)))

    grid = (B_pad // b_tile,)
    kernel = functools.partial(_mdd_kernel, lambda_dd=float(lambda_dd),
                               n_time=int(T), has_target=has_target)

    in_specs = [pl.BlockSpec((b_tile, T), lambda i: (i, 0))]
    inputs = [r]
    if has_target:
        in_specs.append(pl.BlockSpec((b_tile, T), lambda i: (i, 0)))
        inputs.append(tgt)

    dd_shape = jax.ShapeDtypeStruct((1, B_pad), jnp.float32)
    dd_spec = pl.BlockSpec((1, b_tile), lambda i: (0, i))
    if has_target:
        out_shape = (dd_shape, jax.ShapeDtypeStruct((B_pad, 1), jnp.float32))
        out_specs = (dd_spec, pl.BlockSpec((b_tile, 1), lambda i: (i, 0)))
    else:
        out_shape, out_specs = dd_shape, dd_spec

    outs = pl.pallas_call(
        kernel,
        out_shape=out_shape,
        grid_spec=pltpu.PrefetchScalarGridSpec(
            num_scalar_prefetch=0,
            grid=grid,
            in_specs=in_specs,
            out_specs=out_specs,
            scratch_shapes=[pltpu.VMEM((T, b_tile), jnp.float32)],
        ),
        compiler_params=pltpu.CompilerParams(
            dimension_semantics=("parallel",),
            vmem_limit_bytes=48 * 1024 * 1024,
        ),
    )(*inputs)

    if has_target:
        dd_row, mse_col = outs
        loss = dd_row[0, :B] + (1.0 - float(lambda_dd)) * mse_col[:B, 0]
    else:
        loss = outs[0, :B]

    if reduction == "mean":
        return loss.mean()
    elif reduction == "sum":
        return loss.sum()
    elif reduction == "none":
        return loss
    else:
        raise ValueError(f"Unknown reduction: {reduction}")


if __name__ == "__main__":
    key = jax.random.PRNGKey(0)
    k1, k2 = jax.random.split(key)
    B, T = 4, 16
    lambda_dd = 0.5
    returns = 0.1 * jax.random.normal(k1, (B, T), dtype=jnp.float32)
    target = 0.1 * jax.random.normal(k2, (B, T), dtype=jnp.float32)

    loss = max_drawdown_loss(returns, target, lambda_dd=lambda_dd)
    jax.block_until_ready(loss)

    # Pure-JAX reference mirroring the PyTorch module.
    cum = jnp.cumprod(1.0 + returns, axis=1)
    run_max = lax.cummax(cum, axis=1)
    mdd = ((cum - run_max) / run_max).min(axis=1)
    mse = jnp.mean((returns - target) ** 2, axis=1)
    ref = (-lambda_dd * mdd + (1.0 - lambda_dd) * mse).mean()
    assert jnp.allclose(loss, ref, rtol=1e-5, atol=1e-6), (loss, ref)

    # Optional-target path (target_returns=None).
    loss_nt = max_drawdown_loss(returns, None, lambda_dd=lambda_dd)
    jax.block_until_ready(loss_nt)
    ref_nt = (-lambda_dd * mdd).mean()
    assert jnp.allclose(loss_nt, ref_nt, rtol=1e-5, atol=1e-6), (loss_nt, ref_nt)

    print("KERNEL_OK")
</pallas_src>

<mosaic_0001>
module attributes {stable_mosaic.version = 11 : i64} {
  func.func @_mdd_kernel(%arg0: i32, %arg1: memref<4x16xf32, #tpu.memory_space<vmem>>, %arg2: memref<4x16xf32, #tpu.memory_space<vmem>>, %arg3: memref<1x4xf32, #tpu.memory_space<vmem>>, %arg4: memref<4x1xf32, #tpu.memory_space<vmem>>, %arg5: memref<16x4xf32, #tpu.memory_space<vmem>>) attributes {dimension_semantics = [#tpu.dimension_semantics<parallel>], iteration_bounds = array<i64: 1>, scalar_prefetch = 0 : i64, scratch_operands = 1 : i64, tpu.core_type = #tpu.core_type<tc>, window_params = [{transform_indices = @transform_0, window_bounds = array<i64: 4, 16>}, {transform_indices = @transform_1, window_bounds = array<i64: 4, 16>}, {transform_indices = @transform_2, window_bounds = array<i64: 1, 4>}, {transform_indices = @transform_3, window_bounds = array<i64: 4, 1>}]} {
    %c0 = arith.constant 0 : index
    %c0_0 = arith.constant 0 : index
    %0 = vector.load %arg1[%c0, %c0_0] : memref<4x16xf32, #tpu.memory_space<vmem>>, vector<4x16xf32>
    %1 = tpu.transpose %0, [1, 0] : vector<4x16xf32> -> vector<16x4xf32>
    %c0_1 = arith.constant 0 : index
    %c0_2 = arith.constant 0 : index
    %2 = vector.load %arg5[%c0_1, %c0_2] : memref<16x4xf32, #tpu.memory_space<vmem>>, vector<16x4xf32>
    tpu.vector_store %arg5[%c0_1, %c0_2], %1 {strides = array<i32>} : memref<16x4xf32, #tpu.memory_space<vmem>>, vector<16x4xf32>,
    %cst = arith.constant 1.000000e+00 : f32
    %3 = vector.broadcast %cst : f32 to vector<1x4xf32>
    %c0_3 = arith.constant 0 : index
    %c0_4 = arith.constant 0 : index
    %4 = vector.load %arg5[%c0_3, %c0_4] : memref<16x4xf32, #tpu.memory_space<vmem>>, vector<8x4xf32>
    %5 = vector.extract_strided_slice %4 {offsets = [1, 0], sizes = [1, 4], strides = [1, 1]} : vector<8x4xf32> to vector<1x4xf32>
    %cst_5 = arith.constant 1.000000e+00 : f32
    %6 = vector.broadcast %cst_5 : f32 to vector<1x4xf32>
    %7 = arith.addf %6, %5 : vector<1x4xf32>
    %8 = arith.mulf %3, %7 : vector<1x4xf32>
    %9 = arith.minimumf %3, %8 : vector<1x4xf32>
    %cst_6 = arith.constant 1.000000e+00 : f32
    %10 = vector.broadcast %cst_6 : f32 to vector<1x4xf32>
    %11 = arith.minimumf %10, %8 : vector<1x4xf32>
    %12 = vector.extract_strided_slice %4 {offsets = [2, 0], sizes = [1, 4], strides = [1, 1]} : vector<8x4xf32> to vector<1x4xf32>
    %cst_7 = arith.constant 1.000000e+00 : f32
    %13 = vector.broadcast %cst_7 : f32 to vector<1x4xf32>
    %14 = arith.addf %13, %12 : vector<1x4xf32>
    %15 = arith.mulf %11, %14 : vector<1x4xf32>
    %16 = arith.minimumf %9, %15 : vector<1x4xf32>
    %cst_8 = arith.constant 1.000000e+00 : f32
    %17 = vector.broadcast %cst_8 : f32 to vector<1x4xf32>
    %18 = arith.minimumf %17, %15 : vector<1x4xf32>
    %19 = vector.extract_strided_slice %4 {offsets = [3, 0], sizes = [1, 4], strides = [1, 1]} : vector<8x4xf32> to vector<1x4xf32>
    %cst_9 = arith.constant 1.000000e+00 : f32
    %20 = vector.broadcast %cst_9 : f32 to vector<1x4xf32>
    %21 = arith.addf %20, %19 : vector<1x4xf32>
    %22 = arith.mulf %18, %21 : vector<1x4xf32>
    %23 = arith.minimumf %16, %22 : vector<1x4xf32>
    %cst_10 = arith.constant 1.000000e+00 : f32
    %24 = vector.broadcast %cst_10 : f32 to vector<1x4xf32>
    %25 = arith.minimumf %24, %22 : vector<1x4xf32>
    %26 = vector.extract_strided_slice %4 {offsets = [4, 0], sizes = [1, 4], strides = [1, 1]} : vector<8x4xf32> to vector<1x4xf32>
    %cst_11 = arith.constant 1.000000e+00 : f32
    %27 = vector.broadcast %cst_11 : f32 to vector<1x4xf32>
    %28 = arith.addf %27, %26 : vector<1x4xf32>
    %29 = arith.mulf %25, %28 : vector<1x4xf32>
    %30 = arith.minimumf %23, %29 : vector<1x4xf32>
    %cst_12 = arith.constant 1.000000e+00 : f32
    %31 = vector.broadcast %cst_12 : f32 to vector<1x4xf32>
    %32 = arith.minimumf %31, %29 : vector<1x4xf32>
    %33 = vector.extract_strided_slice %4 {offsets = [5, 0], sizes = [1, 4], strides = [1, 1]} : vector<8x4xf32> to vector<1x4xf32>
    %cst_13 = arith.constant 1.000000e+00 : f32
    %34 = vector.broadcast %cst_13 : f32 to vector<1x4xf32>
    %35 = arith.addf %34, %33 : vector<1x4xf32>
    %36 = arith.mulf %32, %35 : vector<1x4xf32>
    %37 = arith.minimumf %30, %36 : vector<1x4xf32>
    %cst_14 = arith.constant 1.000000e+00 : f32
    %38 = vector.broadcast %cst_14 : f32 to vector<1x4xf32>
    %39 = arith.minimumf %38, %36 : vector<1x4xf32>
    %40 = vector.extract_strided_slice %4 {offsets = [6, 0], sizes = [1, 4], strides = [1, 1]} : vector<8x4xf32> to vector<1x4xf32>
    %cst_15 = arith.constant 1.000000e+00 : f32
    %41 = vector.broadcast %cst_15 : f32 to vector<1x4xf32>
    %42 = arith.addf %41, %40 : vector<1x4xf32>
    %43 = arith.mulf %39, %42 : vector<1x4xf32>
    %44 = arith.minimumf %37, %43 : vector<1x4xf32>
    %cst_16 = arith.constant 1.000000e+00 : f32
    %45 = vector.broadcast %cst_16 : f32 to vector<1x4xf32>
    %46 = arith.minimumf %45, %43 : vector<1x4xf32>
    %47 = vector.extract_strided_slice %4 {offsets = [7, 0], sizes = [1, 4], strides = [1, 1]} : vector<8x4xf32> to vector<1x4xf32>
    %cst_17 = arith.constant 1.000000e+00 : f32
    %48 = vector.broadcast %cst_17 : f32 to vector<1x4xf32>
    %49 = arith.addf %48, %47 : vector<1x4xf32>
    %50 = arith.mulf %46, %49 : vector<1x4xf32>
    %51 = arith.minimumf %44, %50 : vector<1x4xf32>
    %cst_18 = arith.constant 1.000000e+00 : f32
    %52 = vector.broadcast %cst_18 : f32 to vector<1x4xf32>
    %53 = arith.minimumf %52, %50 : vector<1x4xf32>
    %c0_i32 = arith.constant 0 : i32
    %c8_i32 = arith.constant 8 : i32
    %54 = arith.muli %c0_i32, %c8_i32 : i32
    %c8_i32_19 = arith.constant 8 : i32
    %55 = arith.addi %c8_i32_19, %54 : i32
    %56 = tpu.assume_multiple %55, 8 : i32
    %57 = arith.index_cast %56 : i32 to index
    %c0_20 = arith.constant 0 : index
    %58 = vector.load %arg5[%57, %c0_20] : memref<16x4xf32, #tpu.memory_space<vmem>>, vector<8x4xf32>
    %59 = vector.extract_strided_slice %58 {offsets = [0, 0], sizes = [1, 4], strides = [1, 1]} : vector<8x4xf32> to vector<1x4xf32>
    %cst_21 = arith.constant 1.000000e+00 : f32
    %60 = vector.broadcast %cst_21 : f32 to vector<1x4xf32>
    %61 = arith.addf %60, %59 : vector<1x4xf32>
    %62 = arith.mulf %53, %61 : vector<1x4xf32>
    %63 = arith.minimumf %51, %62 : vector<1x4xf32>
    %cst_22 = arith.constant 1.000000e+00 : f32
    %64 = vector.broadcast %cst_22 : f32 to vector<1x4xf32>
    %65 = arith.minimumf %64, %62 : vector<1x4xf32>
    %66 = vector.extract_strided_slice %58 {offsets = [1, 0], sizes = [1, 4], strides = [1, 1]} : vector<8x4xf32> to vector<1x4xf32>
    %cst_23 = arith.constant 1.000000e+00 : f32
    %67 = vector.broadcast %cst_23 : f32 to vector<1x4xf32>
    %68 = arith.addf %67, %66 : vector<1x4xf32>
    %69 = arith.mulf %65, %68 : vector<1x4xf32>
    %70 = arith.minimumf %63, %69 : vector<1x4xf32>
    %cst_24 = arith.constant 1.000000e+00 : f32
    %71 = vector.broadcast %cst_24 : f32 to vector<1x4xf32>
    %72 = arith.minimumf %71, %69 : vector<1x4xf32>
    %73 = vector.extract_strided_slice %58 {offsets = [2, 0], sizes = [1, 4], strides = [1, 1]} : vector<8x4xf32> to vector<1x4xf32>
    %cst_25 = arith.constant 1.000000e+00 : f32
    %74 = vector.broadcast %cst_25 : f32 to vector<1x4xf32>
    %75 = arith.addf %74, %73 : vector<1x4xf32>
    %76 = arith.mulf %72, %75 : vector<1x4xf32>
    %77 = arith.minimumf %70, %76 : vector<1x4xf32>
    %cst_26 = arith.constant 1.000000e+00 : f32
    %78 = vector.broadcast %cst_26 : f32 to vector<1x4xf32>
    %79 = arith.minimumf %78, %76 : vector<1x4xf32>
    %80 = vector.extract_strided_slice %58 {offsets = [3, 0], sizes = [1, 4], strides = [1, 1]} : vector<8x4xf32> to vector<1x4xf32>
    %cst_27 = arith.constant 1.000000e+00 : f32
    %81 = vector.broadcast %cst_27 : f32 to vector<1x4xf32>
    %82 = arith.addf %81, %80 : vector<1x4xf32>
    %83 = arith.mulf %79, %82 : vector<1x4xf32>
    %84 = arith.minimumf %77, %83 : vector<1x4xf32>
    %cst_28 = arith.constant 1.000000e+00 : f32
    %85 = vector.broadcast %cst_28 : f32 to vector<1x4xf32>
    %86 = arith.minimumf %85, %83 : vector<1x4xf32>
    %87 = vector.extract_strided_slice %58 {offsets = [4, 0], sizes = [1, 4], strides = [1, 1]} : vector<8x4xf32> to vector<1x4xf32>
    %cst_29 = arith.constant 1.000000e+00 : f32
    %88 = vector.broadcast %cst_29 : f32 to vector<1x4xf32>
    %89 = arith.addf %88, %87 : vector<1x4xf32>
    %90 = arith.mulf %86, %89 : vector<1x4xf32>
    %91 = arith.minimumf %84, %90 : vector<1x4xf32>
    %cst_30 = arith.constant 1.000000e+00 : f32
    %92 = vector.broadcast %cst_30 : f32 to vector<1x4xf32>
    %93 = arith.minimumf %92, %90 : vector<1x4xf32>
    %94 = vector.extract_strided_slice %58 {offsets = [5, 0], sizes = [1, 4], strides = [1, 1]} : vector<8x4xf32> to vector<1x4xf32>
    %cst_31 = arith.constant 1.000000e+00 : f32
    %95 = vector.broadcast %cst_31 : f32 to vector<1x4xf32>
    %96 = arith.addf %95, %94 : vector<1x4xf32>
    %97 = arith.mulf %93, %96 : vector<1x4xf32>
    %98 = arith.minimumf %91, %97 : vector<1x4xf32>
    %cst_32 = arith.constant 1.000000e+00 : f32
    %99 = vector.broadcast %cst_32 : f32 to vector<1x4xf32>
    %100 = arith.minimumf %99, %97 : vector<1x4xf32>
    %101 = vector.extract_strided_slice %58 {offsets = [6, 0], sizes = [1, 4], strides = [1, 1]} : vector<8x4xf32> to vector<1x4xf32>
    %cst_33 = arith.constant 1.000000e+00 : f32
    %102 = vector.broadcast %cst_33 : f32 to vector<1x4xf32>
    %103 = arith.addf %102, %101 : vector<1x4xf32>
    %104 = arith.mulf %100, %103 : vector<1x4xf32>
    %105 = arith.minimumf %98, %104 : vector<1x4xf32>
    %cst_34 = arith.constant 1.000000e+00 : f32
    %106 = vector.broadcast %cst_34 : f32 to vector<1x4xf32>
    %107 = arith.minimumf %106, %104 : vector<1x4xf32>
    %108 = vector.extract_strided_slice %58 {offsets = [7, 0], sizes = [1, 4], strides = [1, 1]} : vector<8x4xf32> to vector<1x4xf32>
    %cst_35 = arith.constant 1.000000e+00 : f32
    %109 = vector.broadcast %cst_35 : f32 to vector<1x4xf32>
    %110 = arith.addf %109, %108 : vector<1x4xf32>
    %111 = arith.mulf %107, %110 : vector<1x4xf32>
    %112 = arith.minimumf %105, %111 : vector<1x4xf32>
    %cst_36 = arith.constant 1.000000e+00 : f32
    %113 = vector.broadcast %cst_36 : f32 to vector<1x4xf32>
    %114 = arith.minimumf %113, %111 : vector<1x4xf32>
    %c1_i32 = arith.constant 1 : i32
    %cst_37 = arith.constant 1.000000e+00 : f32
    %115 = vector.broadcast %cst_37 : f32 to vector<1x4xf32>
    %116 = arith.subf %115, %112 : vector<1x4xf32>
    %cst_38 = arith.constant 5.000000e-01 : f32
    %117 = vector.broadcast %cst_38 : f32 to vector<1x4xf32>
    %118 = arith.mulf %117, %116 : vector<1x4xf32>
    %c0_39 = arith.constant 0 : index
    %c0_40 = arith.constant 0 : index
    %119 = vector.load %arg3[%c0_39, %c0_40] : memref<1x4xf32, #tpu.memory_space<vmem>>, vector<1x4xf32>
    tpu.vector_store %arg3[%c0_39, %c0_40], %118 {strides = array<i32>} : memref<1x4xf32, #tpu.memory_space<vmem>>, vector<1x4xf32>,
    %c0_41 = arith.constant 0 : index
    %c0_42 = arith.constant 0 : index
    %120 = vector.load %arg1[%c0_41, %c0_42] : memref<4x16xf32, #tpu.memory_space<vmem>>, vector<4x16xf32>
    %c0_43 = arith.constant 0 : index
    %c0_44 = arith.constant 0 : index
    %121 = vector.load %arg2[%c0_43, %c0_44] : memref<4x16xf32, #tpu.memory_space<vmem>>, vector<4x16xf32>
    %122 = arith.subf %120, %121 : vector<4x16xf32>
    %123 = arith.mulf %122, %122 : vector<4x16xf32>
    %cst_45 = arith.constant dense<0.000000e+00> : vector<4xf32>
    %124 = vector.multi_reduction <add>, %123, %cst_45 [1] : vector<4x16xf32> to vector<4xf32>
    %125 = vector.shape_cast %124 : vector<4xf32> to vector<4x1xf32>
    %cst_46 = arith.constant 6.250000e-02 : f32
    %126 = vector.broadcast %cst_46 : f32 to vector<4x1xf32>
    %127 = arith.mulf %125, %126 : vector<4x1xf32>
    %c0_47 = arith.constant 0 : index
    %c0_48 = arith.constant 0 : index
    %128 = vector.load %arg4[%c0_47, %c0_48] : memref<4x1xf32, #tpu.memory_space<vmem>>, vector<4x1xf32>
    tpu.vector_store %arg4[%c0_47, %c0_48], %127 {strides = array<i32>} : memref<4x1xf32, #tpu.memory_space<vmem>>, vector<4x1xf32>,
    return
  }
  func.func @transform_0(%arg0: i32) -> (i32, i32) {
    %c0_i32 = arith.constant 0 : i32
    %c0_i32_0 = arith.constant 0 : i32
    return %arg0, %c0_i32 : i32, i32
  }
  func.func @transform_1(%arg0: i32) -> (i32, i32) {
    %c0_i32 = arith.constant 0 : i32
    %c0_i32_0 = arith.constant 0 : i32
    return %arg0, %c0_i32 : i32, i32
  }
  func.func @transform_2(%arg0: i32) -> (i32, i32) {
    %c0_i32 = arith.constant 0 : i32
    %c0_i32_0 = arith.constant 0 : i32
    return %c0_i32, %arg0 : i32, i32
  }
  func.func @transform_3(%arg0: i32) -> (i32, i32) {
    %c0_i32 = arith.constant 0 : i32
    %c0_i32_0 = arith.constant 0 : i32
    return %arg0, %c0_i32 : i32, i32
  }
}

</mosaic_0001>

<llo_original>
// kernel: tpu_custom_call.1
$region0: #{tpu_custom_call.1}
  #allocation0 [shape = 'u32[]', space=smem, size = 0x4, offset = 0x4, fixed_abs, tag = 'smem constant byte address 0x4 - core index']
  #allocation1 [shape = 'u32[72,128]{1,0:T(1,128)}', space=vmem, size = 0x9000, scoped, tag = 'internal scratch']
  #allocation2 [shape = 'f32[16,4]{1,0:T(8,128)}', space=vmem, size = 0x2000, scoped, tag = 'scratch operand']
  %s0 = inlined_call_operand.hbm [shape: f32[4,16], index: 0, kind: input, shape index: {}]
  %s1 = inlined_call_operand.hbm [shape: f32[4,16], index: 1, kind: input, shape index: {}]
  %s2 = inlined_call_operand.hbm [shape: f32[1,4], index: 2, kind: output, shape index: {0}]
  %s3 = inlined_call_operand.vmem [shape: f32[4,1], index: 3, kind: output, shape index: {1}]
  %4 = xla_tuple %s2, %s3
  %s5 = sld [smem:[#allocation0]]
  $region34: #{tpu_custom_call.1} parent=0
    _
  %s7 = ssub.s32 1, %s5
  %s8 = scalar_select 0, %s7, %s5
  $region1: #{tpu_custom_call.1} parent=0
    #allocation3 [shape = 'u8[2048]{0}', space=vmem, size = 0x800, scoped, tag = 'input window, operand 0, single buffered']
    #allocation4 [shape = 's32[1]{0}', space=sflag, size = 0x4, scoped, tag = 'scoped memory for tpu_custom_call.1']
    #allocation5 [shape = 's32[1]{0}', space=sflag, size = 0x4, scoped, tag = 'scoped memory for tpu_custom_call.1']
    #allocation6 [shape = 'u8[2048]{0}', space=vmem, size = 0x800, scoped, tag = 'input window, operand 1, single buffered']
    #allocation7 [shape = 's32[1]{0}', space=sflag, size = 0x4, scoped, tag = 'scoped memory for tpu_custom_call.1']
    #allocation8 [shape = 'u8[512]{0}', space=vmem, size = 0x400, scoped, tag = 'output window, operand 0, single buffered']
    %9 = vsyncpa [#allocation4], 0
    %10 = vsyncpa [#allocation7], 0
    %11 = vsyncpa [#allocation5], 0
    // Predicated region
    $region2: #{tpu_custom_call.1} parent=1 // pred_check
      _
    $region3: #{tpu_custom_call.1} parent=1 // pred_check_branch
      %13 = sbr.rel (0) target = $region5
    $region4: #{tpu_custom_call.1} parent=1 // pred_region
      %15 = vsyncadd [#allocation4], 0
      %s17 = sshll.u32 %s0, 4
      %s18 = int_to_ptr.hbm [resolvable:$true] %s17
      %s19 = sshll.u32 [#allocation3], 4
      %s20 = int_to_ptr.vmem [resolvable:$true] %s19
      %22 = dma.hbm_to_vmem [thread:$0]  %s18, 64, %s20, [#allocation4]
    $region5: #{tpu_custom_call.1} parent=1 // pred_fallthru
      _
    // Predicated region
    $region6: #{tpu_custom_call.1} parent=1 // pred_check
      _
    $region7: #{tpu_custom_call.1} parent=1 // pred_check_branch
      %24 = sbr.rel (0) target = $region9
    $region8: #{tpu_custom_call.1} parent=1 // pred_region
      %26 = vsyncadd [#allocation7], 0
      %s28 = sshll.u32 %s1, 4
      %s29 = int_to_ptr.hbm [resolvable:$true] %s28
      %s30 = sshll.u32 [#allocation6], 4
      %s31 = int_to_ptr.vmem [resolvable:$true] %s30
      %33 = dma.hbm_to_vmem [thread:$0]  %s29, 64, %s31, [#allocation7]
    $region9: #{tpu_custom_call.1} parent=1 // pred_fallthru
      _
    // Predicated region
    $region10: #{tpu_custom_call.1} parent=1 // pred_check
      _
    $region11: #{tpu_custom_call.1} parent=1 // pred_check_branch
      %35 = sbr.rel (0) target = $region13
    $region12: #{tpu_custom_call.1} parent=1 // pred_region
      %37 = dma.done [#allocation4], 64
    $region13: #{tpu_custom_call.1} parent=1 // pred_fallthru
      _
    // Predicated region
    $region14: #{tpu_custom_call.1} parent=1 // pred_check
      _
    $region15: #{tpu_custom_call.1} parent=1 // pred_check_branch
      %39 = sbr.rel (0) target = $region17
    $region16: #{tpu_custom_call.1} parent=1 // pred_region
      %41 = dma.done [#allocation7], 64
    $region17: #{tpu_custom_call.1} parent=1 // pred_fallthru
      _
    %v42 = vld [vmem:[#allocation3] sm:$0xf]
    %43 = vxpose.xlu0.b32.start [1/16] %v42, 128
    %44 = vxpose.xlu0.b32.cont [2/16] 0.0, 128
    %45 = vxpose.xlu0.b32.cont [3/16] 0.0, 128
    %46 = vxpose.xlu0.b32.cont [4/16] 0.0, 128
    %47 = vxpose.xlu0.b32.cont [5/16] 0.0, 128
    %48 = vxpose.xlu0.b32.cont [6/16] 0.0, 128
    %49 = vxpose.xlu0.b32.cont [7/16] 0.0, 128
    %50 = vxpose.xlu0.b32.cont [8/16] 0.0, 128
    %51 = vxpose.xlu0.b32.cont [9/16] 0.0, 128
    %52 = vxpose.xlu0.b32.cont [10/16] 0.0, 128
    %53 = vxpose.xlu0.b32.cont [11/16] 0.0, 128
    %54 = vxpose.xlu0.b32.cont [12/16] 0.0, 128
    %55 = vxpose.xlu0.b32.cont [13/16] 0.0, 128
    %56 = vxpose.xlu0.b32.cont [14/16] 0.0, 128
    %57 = vxpose.xlu0.b32.cont [15/16] 0.0, 128
    %58 = vxpose.xlu0.b32.end [16/16] 0.0, 128
    %v59 = vpop.trf.xlu0
    %v60 = vpop.trf.xlu0
    %v61 = vpop.trf.xlu0
    %v62 = vpop.trf.xlu0
    %v63 = vpop.trf.xlu0
    %v64 = vpop.trf.xlu0
    %v65 = vpop.trf.xlu0
    %v66 = vpop.trf.xlu0
    %v67 = vpop.trf.xlu0
    %v68 = vpop.trf.xlu0
    %v69 = vpop.trf.xlu0
    %v70 = vpop.trf.xlu0
    %v71 = vpop.trf.xlu0
    %v72 = vpop.trf.xlu0
    %v73 = vpop.trf.xlu0
    %v74 = vpop.trf.xlu0
    %vm75 = vcmask 31744
    %76 = vst.msk [vmem:[#allocation2] sm:$0xff] %vm75, %v59
    %77 = vst.msk [vmem:[#allocation2 + $0x8] sm:$0xff] %vm75, %v60
    %v78 = vld [vmem:[#allocation2] sm:$0xff]
    %v79 = vadd.f32 %v78, 1.0
    %v80 = vmin.f32 %v79, 1.0
    %v82 = vrot.slane %v79, 1
    %v84 = vmul.f32 %v80, %v82
    %v85 = vmin.f32 %v80, %v84
    %v86 = vmin.f32 %v84, 1.0
    %v87 = vrot.slane %v79, 2
    %v89 = vmul.f32 %v86, %v87
    %v90 = vmin.f32 %v85, %v89
    %v91 = vmin.f32 %v89, 1.0
    %v92 = vrot.slane %v79, 3
    %v94 = vmul.f32 %v91, %v92
    %v95 = vmin.f32 %v90, %v94
    %v96 = vmin.f32 %v94, 1.0
    %v97 = vrot.slane %v79, 4
    %v99 = vmul.f32 %v96, %v97
    %v100 = vmin.f32 %v95, %v99
    %v101 = vmin.f32 %v99, 1.0
    %v102 = vrot.slane %v79, 5
    %v104 = vmul.f32 %v101, %v102
    %v105 = vmin.f32 %v100, %v104
    %v106 = vmin.f32 %v104, 1.0
    %v107 = vrot.slane %v79, 6
    %v109 = vmul.f32 %v106, %v107
    %v110 = vmin.f32 %v105, %v109
    %v111 = vmin.f32 %v109, 1.0
    %s112 = scalar_lea.vmem [#allocation2], 8
    %v113 = vld [vmem:[%s112] sm:$0xff]
    %v114 = vadd.f32 %v113, 1.0
    %v116 = vrot.slane %v114, 7
    %v118 = vmul.f32 %v111, %v116
    %v119 = vmin.f32 %v110, %v118
    %v120 = vmin.f32 %v118, 1.0
    %v121 = vmul.f32 %v120, %v114
    %v122 = vmin.f32 %v119, %v121
    %v123 = vmin.f32 %v121, 1.0
    %v124 = vrot.slane %v114, 1
    %v126 = vmul.f32 %v123, %v124
    %v127 = vmin.f32 %v122, %v126
    %v128 = vmin.f32 %v126, 1.0
    %v129 = vrot.slane %v114, 2
    %v131 = vmul.f32 %v128, %v129
    %v132 = vmin.f32 %v127, %v131
    %v133 = vmin.f32 %v131, 1.0
    %v134 = vrot.slane %v114, 3
    %v136 = vmul.f32 %v133, %v134
    %v137 = vmin.f32 %v132, %v136
    %v138 = vmin.f32 %v136, 1.0
    %v139 = vrot.slane %v114, 4
    %v141 = vmul.f32 %v138, %v139
    %v142 = vmin.f32 %v137, %v141
    %v143 = vmin.f32 %v141, 1.0
    %v144 = vrot.slane %v114, 5
    %v146 = vmul.f32 %v143, %v144
    %v147 = vmin.f32 %v142, %v146
    %v148 = vmin.f32 %v146, 1.0
    %v149 = vrot.slane %v114, 6
    %v151 = vmul.f32 %v148, %v149
    %v152 = vmin.f32 %v147, %v151
    %v153 = vsub.f32 1.0, %v152
    %v154 = vmul.f32 %v153, 0.5
    %vm155 = vcmask 25601
    %156 = vst.msk [vmem:[#allocation8 - $0x1] sm:$0x2] %vm155, %v154
    %v157 = vld [vmem:[#allocation3] sm:$0xf]
    %v158 = vld [vmem:[#allocation6] sm:$0xf]
    %v159 = vsub.f32 %v157, %v158
    %v160 = vmul.f32 %v159, %v159
    %vm161 = vcmask 125952
    %v162 = vsel %vm161, %v160, 0.0
    %163 = vadd.xlane.f32.xlu0 %v162
    %v164 = vpop.xlane.xlu0 %163
    %v165 = vmul.f32 %v164, 0.0625
    %vm166 = vcmask 3072
    %167 = vst.msk [vmem:[%s3] sm:$0xf] %vm166, %v165
    // Predicated region
    $region18: #{tpu_custom_call.1} parent=1 // pred_check
      _
    $region19: #{tpu_custom_call.1} parent=1 // pred_check_branch
      %169 = sbr.rel (0) target = $region21
    $region20: #{tpu_custom_call.1} parent=1 // pred_region
      %171 = vsyncadd [#allocation5], 0
      %s173 = sshll.u32 [#allocation8], 4
      %s174 = int_to_ptr.vmem [resolvable:$true] %s173
      %s175 = sshll.u32 %s2, 4
      %s176 = int_to_ptr.hbm [resolvable:$true] %s175
      %178 = dma.vmem_to_hbm [thread:$0]  %s174, 16, %s176, [#allocation5]
    $region21: #{tpu_custom_call.1} parent=1 // pred_fallthru
      _
    // Predicated region
    $region22: #{tpu_custom_call.1} parent=1 // pred_check
      _
    $region23: #{tpu_custom_call.1} parent=1 // pred_check_branch
      %180 = sbr.rel (0) target = $region25
    $region24: #{tpu_custom_call.1} parent=1 // pred_region
      _
    $region25: #{tpu_custom_call.1} parent=1 // pred_fallthru
      _
    // Predicated region
    $region26: #{tpu_custom_call.1} parent=1 // pred_check
      _
    $region27: #{tpu_custom_call.1} parent=1 // pred_check_branch
      %182 = sbr.rel (0) target = $region29
    $region28: #{tpu_custom_call.1} parent=1 // pred_region
      %184 = dma.done [#allocation5], 16
    $region29: #{tpu_custom_call.1} parent=1 // pred_fallthru
      _
    // Predicated region
    $region30: #{tpu_custom_call.1} parent=1 // pred_check
      _
    $region31: #{tpu_custom_call.1} parent=1 // pred_check_branch
      %186 = sbr.rel (0) target = $region33
    $region32: #{tpu_custom_call.1} parent=1 // pred_region
      _
    $region33: #{tpu_custom_call.1} parent=1 // pred_fallthru
      _
    %187 = vsyncpa [#allocation4], 1
    %188 = vsyncpa [#allocation7], 1
    %189 = vsyncpa [#allocation5], 1

</llo_original>
